<compile_context>
chip_gen: v6e
topology: v6e:2x2x1
jax: 0.10.0
libtpu: 0.0.40
codegen_flags: <defaults>
</compile_context>

<pallas_src>
import jax
import jax.numpy as jnp
from jax.experimental import pallas as pl
from jax.experimental.pallas import tpu as pltpu


def _gelu(x):
    # TODO(synk): PyTorch nn.GELU() default is the exact erf-based GELU; we use
    # the tanh approximation (EUP-friendly, guaranteed Mosaic lowering).
    return jax.nn.gelu(x, approximate=True)


def _round_up(x, m):
    return ((x + m - 1) // m) * m


# --------------------------------------------------------------------------
# Kernels
# --------------------------------------------------------------------------
def _mlp_partial(x_ref, w1_ref, b1_ref, w2_ref):
    """One H-block partial: gelu(x @ W1_h + b1_h) @ W2_h, f32 accumulate."""
    h_idx = pl.program_id(1)
    h = jnp.dot(x_ref[...], w1_ref[...], preferred_element_type=jnp.float32)
    # b1 is resident with shape (num_h, th); row h_idx is this block's bias.
    h = h + b1_ref[pl.ds(h_idx, 1), :].astype(jnp.float32)
    a = _gelu(h)                                   # elementwise in f32
    # dropout(p=0.0) is the identity — nothing to do.
    return jnp.dot(a.astype(w2_ref.dtype), w2_ref[...],
                   preferred_element_type=jnp.float32)


def _mlp_kernel_acc(x_ref, w1_ref, b1_ref, w2_ref, b2_ref, o_ref, acc_ref):
    """Low-precision output: accumulate in f32 scratch, cast at the end."""
    h_idx = pl.program_id(1)
    part = _mlp_partial(x_ref, w1_ref, b1_ref, w2_ref)

    @pl.when(h_idx == 0)
    def _():
        acc_ref[...] = part + b2_ref[...].astype(jnp.float32)

    @pl.when(h_idx > 0)
    def _():
        acc_ref[...] += part

    @pl.when(h_idx == pl.num_programs(1) - 1)
    def _():
        o_ref[...] = acc_ref[...].astype(o_ref.dtype)


def _mlp_kernel_noacc(x_ref, w1_ref, b1_ref, w2_ref, b2_ref, o_ref):
    """f32 output: the resident output block IS the accumulator (no scratch)."""
    h_idx = pl.program_id(1)
    part = _mlp_partial(x_ref, w1_ref, b1_ref, w2_ref)

    @pl.when(h_idx == 0)
    def _():
        o_ref[...] = part + b2_ref[...].astype(jnp.float32)

    @pl.when(h_idx > 0)
    def _():
        o_ref[...] += part


# --------------------------------------------------------------------------
# Tile selection
# --------------------------------------------------------------------------
def _pick_tiles(M, D_in, H, D_out, itemsize, pack, budget, tile_m, tile_h,
                need_acc):
    """Pick (tm, th, Hpad) maximizing tm within the VMEM budget."""
    m_full = _round_up(max(M, 1), pack)
    cap = 1024 if tile_m is None else tile_m
    cap = max(pack, _round_up(min(cap, m_full), pack))

    if H % 128 == 0:
        # Avoid weight padding: largest 128-multiple <= tile_h dividing H.
        cands = [c for c in (512, 384, 256, 128)
                 if c <= max(tile_h, 128) and H % c == 0]
        if not cands:
            cands = [128]
    else:
        cands = [_round_up(min(tile_h, H), 128)]

    def fits(tm, th, hpad):
        # double-buffered per-step blocks + resident b1 (+ f32 acc scratch)
        blocks = tm * D_in + D_in * th + th * D_out + D_out + tm * D_out
        nbytes = 2 * blocks * itemsize + 2 * hpad * itemsize
        if need_acc:
            nbytes += tm * D_out * 4
        return nbytes <= budget

    best = None  # (tm, th, hpad)
    for th in cands:
        hpad = _round_up(H, th)
        tm = cap
        while tm > pack and not fits(tm, th, hpad):
            tm -= pack
        if best is None or tm > best[0] or (tm == best[0] and th > best[1]):
            best = (tm, th, hpad)
    return best


# --------------------------------------------------------------------------
# Wrapper
# --------------------------------------------------------------------------
def mlp_pallas(x, w1, b1, w2, b2, *, tile_m=None, tile_h=512):
    """x: [..., D_in] -> [..., D_out].  tile_m/tile_h are sweepable overrides."""
    orig_lead = x.shape[:-1]
    D_in = x.shape[-1]
    H = w1.shape[1]
    D_out = w2.shape[1]

    x2 = x.reshape(-1, D_in)
    M = x2.shape[0]
    dtype = x.dtype
    itemsize = jnp.dtype(dtype).itemsize
    pack = {1: 32, 2: 16, 4: 8}.get(itemsize, 8)   # sublane packing per dtype

    out_dtype = dtype
    need_acc = jnp.dtype(out_dtype) != jnp.dtype(jnp.float32)

    # Generation-aware VMEM budget (v5e/v6e: 128 MiB, v7x: 64 MiB physical).
    try:
        vmem_cap = int(pltpu.get_tpu_info().vmem_capacity_bytes)
    except Exception:
        vmem_cap = 64 << 20
    budget = max(int(0.8 * vmem_cap), 32 << 20)

    tm, th, Hpad = _pick_tiles(M, D_in, H, D_out, itemsize, pack, budget,
                               tile_m, tile_h, need_acc)

    # v7x megacore: make sure the "parallel" M axis has >= 2 tiles for big M
    # so both TensorCores get work (no effect on v5e/v6e single-TC).
    if M > 512 and _round_up(M, tm) // tm < 2:
        tm = max(pack, _round_up((M + 1) // 2, pack))

    Mpad = _round_up(M, tm)
    if Mpad != M:
        x2 = jnp.pad(x2, ((0, Mpad - M), (0, 0)))

    # Weights are only padded when H is not a multiple of 128 (rare case).
    # TODO(synk): for production, pre-pad weights once at init instead of per call.
    if Hpad != H:
        w1 = jnp.pad(w1, ((0, 0), (0, Hpad - H)))
        b1 = jnp.pad(b1, ((0, Hpad - H),))
        w2 = jnp.pad(w2, ((0, Hpad - H), (0, 0)))

    num_m = Mpad // tm
    num_h = Hpad // th
    grid = (num_m, num_h)

    # fc1 bias as one resident (num_h, th) block; row h = H-block h's bias.
    b1_2 = b1.reshape(num_h, th)
    b2_2 = b2.reshape(1, D_out)

    # Cost estimate reflecting actual streamed traffic: the weights are
    # re-read once per M tile; padded dims used throughout.
    flops = 2 * Mpad * D_in * Hpad + 2 * Mpad * Hpad * D_out
    bytes_accessed = itemsize * (Mpad * D_in
                                 + num_m * (D_in * Hpad + Hpad * D_out)
                                 + Hpad + D_out + Mpad * D_out)
    cost = pl.CostEstimate(flops=flops, transcendentals=Mpad * Hpad,
                           bytes_accessed=bytes_accessed)

    in_specs = [
        pl.BlockSpec((tm, D_in),    lambda i, h: (i, 0)),   # x tile (M-resident)
        pl.BlockSpec((D_in, th),    lambda i, h: (0, h)),   # fc1 W block
        pl.BlockSpec((num_h, th),   lambda i, h: (0, 0)),   # fc1 b (resident)
        pl.BlockSpec((th, D_out),   lambda i, h: (h, 0)),   # fc2 W block
        pl.BlockSpec((1, D_out),    lambda i, h: (0, 0)),   # fc2 b
    ]
    out_spec = pl.BlockSpec((tm, D_out), lambda i, h: (i, 0))

    if need_acc:
        kernel = _mlp_kernel_acc
        scratch = [pltpu.VMEM((tm, D_out), jnp.float32)]
    else:
        kernel = _mlp_kernel_noacc
        scratch = []

    out2 = pl.pallas_call(
        kernel,
        out_shape=jax.ShapeDtypeStruct((Mpad, D_out), out_dtype),
        grid_spec=pltpu.PrefetchScalarGridSpec(
            num_scalar_prefetch=0,
            grid=grid,
            in_specs=in_specs,
            out_specs=out_spec,
            scratch_shapes=scratch,
        ),
        compiler_params=pltpu.CompilerParams(
            dimension_semantics=("parallel", "arbitrary"),
            vmem_limit_bytes=budget),
        cost_estimate=cost,
    )(x2, w1, b1_2, w2, b2_2)

    return out2[:M].reshape(orig_lead + (D_out,))


# --------------------------------------------------------------------------
# Params / reference / tests
# --------------------------------------------------------------------------
def init_params(key, in_features, hidden_features, out_features,
                dtype=jnp.float32):
    """Mirrors nn.Linear default init (uniform +/- 1/sqrt(fan_in)), stored as
    (in, out) so the kernel multiplies without a transpose."""
    k1, k2, k3, k4 = jax.random.split(key, 4)
    lim1 = 1.0 / jnp.sqrt(in_features)
    lim2 = 1.0 / jnp.sqrt(hidden_features)
    w1 = jax.random.uniform(k1, (in_features, hidden_features), dtype,
                            minval=-lim1, maxval=lim1)
    b1 = jax.random.uniform(k2, (hidden_features,), dtype,
                            minval=-lim1, maxval=lim1)
    w2 = jax.random.uniform(k3, (hidden_features, out_features), dtype,
                            minval=-lim2, maxval=lim2)
    b2 = jax.random.uniform(k4, (out_features,), dtype,
                            minval=-lim2, maxval=lim2)
    return w1, b1, w2, b2


def _ref_mlp(x, w1, b1, w2, b2):
    h = x.reshape(-1, x.shape[-1]).astype(jnp.float32)
    h = h @ w1.astype(jnp.float32) + b1.astype(jnp.float32)
    a = jax.nn.gelu(h, approximate=True)
    y = a @ w2.astype(jnp.float32) + b2.astype(jnp.float32)
    return y.reshape(x.shape[:-1] + (w2.shape[1],))


if __name__ == "__main__":
    # --- test 1: f32, lane-dense shapes (no-scratch accumulate-into-output)
    key = jax.random.PRNGKey(0)
    kx, kp = jax.random.split(key)
    B, S, D_in, H, D_out = 2, 8, 128, 256, 128
    x = jax.random.normal(kx, (B, S, D_in), dtype=jnp.float32)
    w1, b1, w2, b2 = init_params(kp, D_in, H, D_out, jnp.float32)

    y = jax.block_until_ready(mlp_pallas(x, w1, b1, w2, b2))
    ref = _ref_mlp(x, w1, b1, w2, b2)
    assert jnp.allclose(y, ref, atol=2e-4, rtol=2e-4), "f32 mismatch vs reference"

    # --- test 2: bf16, ragged token count + non-128-multiple hidden (acc path)
    kx2, kp2 = jax.random.split(jax.random.PRNGKey(1))
    B2, S2, D_in2, H2, D_out2 = 2, 5, 128, 192, 128
    xb = jax.random.normal(kx2, (B2, S2, D_in2), jnp.float32).astype(jnp.bfloat16)
    params = init_params(kp2, D_in2, H2, D_out2, jnp.float32)
    w1b, b1b, w2b, b2b = (p.astype(jnp.bfloat16) for p in params)

    yb = jax.block_until_ready(mlp_pallas(xb, w1b, b1b, w2b, b2b))
    refb = _ref_mlp(xb, w1b, b1b, w2b, b2b)
    assert jnp.allclose(yb.astype(jnp.float32), refb, atol=5e-2, rtol=5e-2), \
        "bf16 mismatch vs reference"

    print("KERNEL_OK")
</pallas_src>

<mosaic_0001>
module attributes {stable_mosaic.version = 11 : i64} {
  func.func @_mlp_kernel_noacc(%arg0: i32, %arg1: i32, %arg2: memref<16x128xf32, #tpu.memory_space<vmem>>, %arg3: memref<128x256xf32, #tpu.memory_space<vmem>>, %arg4: memref<1x256xf32, #tpu.memory_space<vmem>>, %arg5: memref<256x128xf32, #tpu.memory_space<vmem>>, %arg6: memref<1x128xf32, #tpu.memory_space<vmem>>, %arg7: memref<16x128xf32, #tpu.memory_space<vmem>>) attributes {dimension_semantics = [#tpu.dimension_semantics<parallel>, #tpu.dimension_semantics<arbitrary>], iteration_bounds = array<i64: 1, 1>, scalar_prefetch = 0 : i64, scratch_operands = 0 : i64, tpu.core_type = #tpu.core_type<tc>, window_params = [{transform_indices = @transform_0, window_bounds = array<i64: 16, 128>}, {transform_indices = @transform_1, window_bounds = array<i64: 128, 256>}, {pipeline_mode = #tpu.pipeline_mode<synchronous>, transform_indices = @transform_2, window_bounds = array<i64: 1, 256>}, {transform_indices = @transform_3, window_bounds = array<i64: 256, 128>}, {pipeline_mode = #tpu.pipeline_mode<synchronous>, transform_indices = @transform_4, window_bounds = array<i64: 1, 128>}, {transform_indices = @transform_5, window_bounds = array<i64: 16, 128>}]} {
    %c0 = arith.constant 0 : index
    %c0_0 = arith.constant 0 : index
    %0 = vector.load %arg2[%c0, %c0_0] : memref<16x128xf32, #tpu.memory_space<vmem>>, vector<16x128xf32>
    %c0_1 = arith.constant 0 : index
    %c0_2 = arith.constant 0 : index
    %1 = vector.load %arg3[%c0_1, %c0_2] : memref<128x256xf32, #tpu.memory_space<vmem>>, vector<128x256xf32>
    %cst = arith.constant dense<0.000000e+00> : vector<16x256xf32>
    %2 = tpu.matmul %0, %1, %cst {dimension_numbers = #tpu.dot_dimension_numbers<[1], [0], [0], [1], [0, 0, 1, 1], [], []>} : vector<16x128xf32>, vector<128x256xf32>, vector<16x256xf32> -> vector<16x256xf32>
    %3 = arith.index_cast %arg1 : i32 to index
    %c0_3 = arith.constant 0 : index
    %4 = vector.load %arg4[%3, %c0_3] : memref<1x256xf32, #tpu.memory_space<vmem>>, vector<1x256xf32>
    %5 = vector.broadcast %4 : vector<1x256xf32> to vector<16x256xf32>
    %6 = arith.addf %2, %5 : vector<16x256xf32>
    %7 = arith.mulf %6, %6 : vector<16x256xf32>
    %8 = arith.mulf %6, %7 : vector<16x256xf32>
    %cst_4 = arith.constant 4.471500e-02 : f32
    %9 = vector.broadcast %cst_4 : f32 to vector<16x256xf32>
    %10 = arith.mulf %9, %8 : vector<16x256xf32>
    %11 = arith.addf %6, %10 : vector<16x256xf32>
    %cst_5 = arith.constant 0.797884583 : f32
    %12 = vector.broadcast %cst_5 : f32 to vector<16x256xf32>
    %13 = arith.mulf %12, %11 : vector<16x256xf32>
    %14 = math.tanh %13 : vector<16x256xf32>
    %cst_6 = arith.constant 1.000000e+00 : f32
    %15 = vector.broadcast %cst_6 : f32 to vector<16x256xf32>
    %16 = arith.addf %15, %14 : vector<16x256xf32>
    %cst_7 = arith.constant 5.000000e-01 : f32
    %17 = vector.broadcast %cst_7 : f32 to vector<16x256xf32>
    %18 = arith.mulf %17, %16 : vector<16x256xf32>
    %19 = arith.mulf %6, %18 : vector<16x256xf32>
    %c0_8 = arith.constant 0 : index
    %c0_9 = arith.constant 0 : index
    %20 = vector.load %arg5[%c0_8, %c0_9] : memref<256x128xf32, #tpu.memory_space<vmem>>, vector<256x128xf32>
    %cst_10 = arith.constant dense<0.000000e+00> : vector<16x128xf32>
    %21 = tpu.matmul %19, %20, %cst_10 {dimension_numbers = #tpu.dot_dimension_numbers<[1], [0], [0], [1], [0, 0, 1, 1], [], []>} : vector<16x256xf32>, vector<256x128xf32>, vector<16x128xf32> -> vector<16x128xf32>
    %c0_i32 = arith.constant 0 : i32
    %22 = arith.cmpi eq, %arg1, %c0_i32 : i32
    %23 = arith.extui %22 : i1 to i32
    %c0_i32_11 = arith.constant 0 : i32
    %24 = arith.cmpi ne, %23, %c0_i32_11 : i32
    scf.if %24 {
      %c0_14 = arith.constant 0 : index
      %c0_15 = arith.constant 0 : index
      %28 = vector.load %arg6[%c0_14, %c0_15] : memref<1x128xf32, #tpu.memory_space<vmem>>, vector<1x128xf32>
      %29 = vector.broadcast %28 : vector<1x128xf32> to vector<16x128xf32>
      %30 = arith.addf %21, %29 : vector<16x128xf32>
      %c0_16 = arith.constant 0 : index
      %c0_17 = arith.constant 0 : index
      %31 = vector.load %arg7[%c0_16, %c0_17] : memref<16x128xf32, #tpu.memory_space<vmem>>, vector<16x128xf32>
      tpu.vector_store %arg7[%c0_16, %c0_17], %30 {strides = array<i32>} : memref<16x128xf32, #tpu.memory_space<vmem>>, vector<16x128xf32>,
    } else {
    }
    %c0_i32_12 = arith.constant 0 : i32
    %25 = arith.cmpi sgt, %arg1, %c0_i32_12 : i32
    %26 = arith.extui %25 : i1 to i32
    %c0_i32_13 = arith.constant 0 : i32
    %27 = arith.cmpi ne, %26, %c0_i32_13 : i32
    scf.if %27 {
      %c0_14 = arith.constant 0 : index
      %c0_15 = arith.constant 0 : index
      %28 = vector.load %arg7[%c0_14, %c0_15] : memref<16x128xf32, #tpu.memory_space<vmem>>, vector<16x128xf32>
      %29 = arith.addf %28, %21 : vector<16x128xf32>
      %c0_16 = arith.constant 0 : index
      %c0_17 = arith.constant 0 : index
      %30 = vector.load %arg7[%c0_16, %c0_17] : memref<16x128xf32, #tpu.memory_space<vmem>>, vector<16x128xf32>
      tpu.vector_store %arg7[%c0_16, %c0_17], %29 {strides = array<i32>} : memref<16x128xf32, #tpu.memory_space<vmem>>, vector<16x128xf32>,
    } else {
    }
    return
  }
  func.func @transform_0(%arg0: i32, %arg1: i32) -> (i32, i32) {
    %c0_i32 = arith.constant 0 : i32
    %c0_i32_0 = arith.constant 0 : i32
    return %arg0, %c0_i32 : i32, i32
  }
  func.func @transform_1(%arg0: i32, %arg1: i32) -> (i32, i32) {
    %c0_i32 = arith.constant 0 : i32
    %c0_i32_0 = arith.constant 0 : i32
    return %c0_i32, %arg1 : i32, i32
  }
  func.func @transform_2(%arg0: i32, %arg1: i32) -> (i32, i32) {
    %c0_i32 = arith.constant 0 : i32
    %c0_i32_0 = arith.constant 0 : i32
    %c0_i32_1 = arith.constant 0 : i32
    return %c0_i32, %c0_i32_0 : i32, i32
  }
  func.func @transform_3(%arg0: i32, %arg1: i32) -> (i32, i32) {
    %c0_i32 = arith.constant 0 : i32
    %c0_i32_0 = arith.constant 0 : i32
    return %arg1, %c0_i32 : i32, i32
  }
  func.func @transform_4(%arg0: i32, %arg1: i32) -> (i32, i32) {
    %c0_i32 = arith.constant 0 : i32
    %c0_i32_0 = arith.constant 0 : i32
    %c0_i32_1 = arith.constant 0 : i32
    return %c0_i32, %c0_i32_0 : i32, i32
  }
  func.func @transform_5(%arg0: i32, %arg1: i32) -> (i32, i32) {
    %c0_i32 = arith.constant 0 : i32
    %c0_i32_0 = arith.constant 0 : i32
    return %arg0, %c0_i32 : i32, i32
  }
}

</mosaic_0001>

<llo_original>
// kernel: tpu_custom_call.1
$region0: #{tpu_custom_call.1}
  #allocation0 [shape = 'u32[]', space=smem, size = 0x4, offset = 0x4, fixed_abs, tag = 'smem constant byte address 0x4 - core index']
  #allocation1 [shape = 'u32[144,128]{1,0:T(1,128)}', space=vmem, size = 0x12000, scoped, tag = 'internal scratch']
  %s0 = inlined_call_operand.hbm [shape: f32[16,128], index: 0, kind: input, shape index: {}]
  %s1 = inlined_call_operand.hbm [shape: f32[128,256], index: 1, kind: input, shape index: {}]
  %s2 = inlined_call_operand.vmem [shape: f32[1,256], index: 2, kind: input, shape index: {}]
  %s3 = inlined_call_operand.hbm [shape: f32[256,128], index: 3, kind: input, shape index: {}]
  %s4 = inlined_call_operand.vmem [shape: f32[1,128], index: 4, kind: input, shape index: {}]
  %s5 = inlined_call_operand.hbm [shape: f32[16,128], index: 5, kind: output, shape index: {}]
  %s6 = sld [smem:[#allocation0]]
  $region50: #{tpu_custom_call.1} parent=0
    _
  %s8 = ssub.s32 1, %s6
  %s9 = scalar_select 0, %s8, %s6
  $region1: #{tpu_custom_call.1} parent=0
    #allocation2 [shape = 'u8[8192]{0}', space=vmem, size = 0x2000, scoped, tag = 'input window, operand 0, single buffered']
    #allocation3 [shape = 's32[1]{0}', space=sflag, size = 0x4, scoped, tag = 'scoped memory for tpu_custom_call.1']
    #allocation4 [shape = 's32[1]{0}', space=sflag, size = 0x4, scoped, tag = 'scoped memory for tpu_custom_call.1']
    #allocation5 [shape = 'u8[131072]{0}', space=vmem, size = 0x20000, scoped, tag = 'input window, operand 1, single buffered']
    #allocation6 [shape = 's32[1]{0}', space=sflag, size = 0x4, scoped, tag = 'scoped memory for tpu_custom_call.1']
    #allocation7 [shape = 'u8[131072]{0}', space=vmem, size = 0x20000, scoped, tag = 'input window, operand 3, single buffered']
    #allocation8 [shape = 'u8[8192]{0}', space=vmem, size = 0x2000, scoped, tag = 'output window, operand 0, single buffered']
    %10 = vsyncpa [#allocation3], 0
    %11 = vsyncpa [#allocation6], 0
    %12 = vsyncpa [#allocation4], 0
    // Predicated region
    $region2: #{tpu_custom_call.1} parent=1 // pred_check
      _
    $region3: #{tpu_custom_call.1} parent=1 // pred_check_branch
      %14 = sbr.rel (0) target = $region5
    $region4: #{tpu_custom_call.1} parent=1 // pred_region
      %s16 = ssub.s32 256, 256
      %17 = vsyncadd [#allocation3], %s16
      %s18 = sshll.u32 [#allocation2], 4
      %s19 = int_to_ptr.vmem [resolvable:$true] %s18
      %24 = dma.hbm_to_vmem [thread:$0]  %s0, 256, %s19, [#allocation3], 128, 128, 8
    $region5: #{tpu_custom_call.1} parent=1 // pred_fallthru
      _
    // Predicated region
    $region6: #{tpu_custom_call.1} parent=1 // pred_check
      _
    $region7: #{tpu_custom_call.1} parent=1 // pred_check_branch
      %26 = sbr.rel (0) target = $region9
    $region8: #{tpu_custom_call.1} parent=1 // pred_region
      %s28 = ssub.s32 4096, 4096
      %29 = vsyncadd [#allocation6], %s28
      %s30 = sshll.u32 [#allocation5], 4
      %s31 = int_to_ptr.vmem [resolvable:$true] %s30
      %36 = dma.hbm_to_vmem [thread:$0]  %s1, 4096, %s31, [#allocation6], 256, 256, 16
    $region9: #{tpu_custom_call.1} parent=1 // pred_fallthru
      _
    // Predicated region
    $region10: #{tpu_custom_call.1} parent=1 // pred_check
      _
    $region11: #{tpu_custom_call.1} parent=1 // pred_check_branch
      %38 = sbr.rel (0) target = $region13
    $region12: #{tpu_custom_call.1} parent=1 // pred_region
      _
    $region13: #{tpu_custom_call.1} parent=1 // pred_fallthru
      _
    // Predicated region
    $region14: #{tpu_custom_call.1} parent=1 // pred_check
      _
    $region15: #{tpu_custom_call.1} parent=1 // pred_check_branch
      %40 = sbr.rel (0) target = $region17
    $region16: #{tpu_custom_call.1} parent=1 // pred_region
      %s42 = ssub.s32 4096, 4096
      %43 = vsyncadd [#allocation6], %s42
      %s44 = sshll.u32 [#allocation7], 4
      %s45 = int_to_ptr.vmem [resolvable:$true] %s44
      %50 = dma.hbm_to_vmem [thread:$0]  %s3, 4096, %s45, [#allocation6], 128, 128, 8
    $region17: #{tpu_custom_call.1} parent=1 // pred_fallthru
      _
    // Predicated region
    $region18: #{tpu_custom_call.1} parent=1 // pred_check
      _
    $region19: #{tpu_custom_call.1} parent=1 // pred_check_branch
      %52 = sbr.rel (0) target = $region21
    $region20: #{tpu_custom_call.1} parent=1 // pred_region
      _
    $region21: #{tpu_custom_call.1} parent=1 // pred_fallthru
      _
    // Predicated region
    $region22: #{tpu_custom_call.1} parent=1 // pred_check
      _
    $region23: #{tpu_custom_call.1} parent=1 // pred_check_branch
      %54 = sbr.rel (0) target = $region25
    $region24: #{tpu_custom_call.1} parent=1 // pred_region
      %55 = dma.done [#allocation3], 256
    $region25: #{tpu_custom_call.1} parent=1 // pred_fallthru
      _
    // Predicated region
    $region26: #{tpu_custom_call.1} parent=1 // pred_check
      _
    $region27: #{tpu_custom_call.1} parent=1 // pred_check_branch
      %57 = sbr.rel (0) target = $region29
    $region28: #{tpu_custom_call.1} parent=1 // pred_region
      %58 = dma.done [#allocation6], 4096
    $region29: #{tpu_custom_call.1} parent=1 // pred_fallthru
      _
    // Predicated region
    $region30: #{tpu_custom_call.1} parent=1 // pred_check
      _
    $region31: #{tpu_custom_call.1} parent=1 // pred_check_branch
      %60 = sbr.rel (0) target = $region33
    $region32: #{tpu_custom_call.1} parent=1 // pred_region
      %61 = dma.done [#allocation6], 4096
    $region33: #{tpu_custom_call.1} parent=1 // pred_fallthru
      _
    %v62 = vld [vmem:[#allocation2] sm:$0xff]
    %v63 = vld [vmem:[#allocation2 + $0x8] sm:$0xff]
    %v64 = vld [vmem:[#allocation5] sm:$0xff]
    %v65 = vld [vmem:[#allocation5 + $0x8] sm:$0xff]
    %v66 = vld [vmem:[#allocation5 + $0x10] sm:$0xff]
    %v67 = vld [vmem:[#allocation5 + $0x18] sm:$0xff]
    %v68 = vld [vmem:[#allocation5 + $0x20] sm:$0xff]
    %v69 = vld [vmem:[#allocation5 + $0x28] sm:$0xff]
    %v70 = vld [vmem:[#allocation5 + $0x30] sm:$0xff]
    %v71 = vld [vmem:[#allocation5 + $0x38] sm:$0xff]
    %v72 = vld [vmem:[#allocation5 + $0x40] sm:$0xff]
    %v73 = vld [vmem:[#allocation5 + $0x48] sm:$0xff]
    %v74 = vld [vmem:[#allocation5 + $0x50] sm:$0xff]
    %v75 = vld [vmem:[#allocation5 + $0x58] sm:$0xff]
    %v76 = vld [vmem:[#allocation5 + $0x60] sm:$0xff]
    %v77 = vld [vmem:[#allocation5 + $0x68] sm:$0xff]
    %v78 = vld [vmem:[#allocation5 + $0x70] sm:$0xff]
    %v79 = vld [vmem:[#allocation5 + $0x78] sm:$0xff]
    %v80 = vld [vmem:[#allocation5 + $0x80] sm:$0xff]
    %v81 = vld [vmem:[#allocation5 + $0x88] sm:$0xff]
    %v82 = vld [vmem:[#allocation5 + $0x90] sm:$0xff]
    %v83 = vld [vmem:[#allocation5 + $0x98] sm:$0xff]
    %v84 = vld [vmem:[#allocation5 + $0xa0] sm:$0xff]
    %v85 = vld [vmem:[#allocation5 + $0xa8] sm:$0xff]
    %v86 = vld [vmem:[#allocation5 + $0xb0] sm:$0xff]
    %v87 = vld [vmem:[#allocation5 + $0xb8] sm:$0xff]
    %v88 = vld [vmem:[#allocation5 + $0xc0] sm:$0xff]
    %v89 = vld [vmem:[#allocation5 + $0xc8] sm:$0xff]
    %v90 = vld [vmem:[#allocation5 + $0xd0] sm:$0xff]
    %v91 = vld [vmem:[#allocation5 + $0xd8] sm:$0xff]
    %v92 = vld [vmem:[#allocation5 + $0xe0] sm:$0xff]
    %v93 = vld [vmem:[#allocation5 + $0xe8] sm:$0xff]
    %v94 = vld [vmem:[#allocation5 + $0xf0] sm:$0xff]
    %v95 = vld [vmem:[#allocation5 + $0xf8] sm:$0xff]
    %s96 = smul.u32 0, 2
    %s97 = scalar_lea.vmem %s2, %s96
    %v98 = vld [vmem:[%s97] sm:$0x3]
    %v100 = vlaneseq
    %v101 = vshrl.u32 %v100, 7
    %v102 = vsub.s32 0, %v101
    %v103 = vrot.slane %v98, %v102
    %v104 = vlaneseq
    %v105 = vshrl.u32 %v104, 7
    %v106 = vsub.s32 1, %v105
    %v107 = vrot.slane %v98, %v106
    %110 = vmatprep.subr.mxu0 %v95
    %111 = vmatpush1.msra.mxu0 %v94
    %112 = vmatprep.subr.mxu0 %v93
    %113 = vmatpush1.msra.mxu0 %v92
    %114 = vmatprep.subr.mxu0 %v91
    %115 = vmatpush1.msra.mxu0 %v90
    %116 = vmatprep.subr.mxu0 %v89
    %117 = vmatpush1.msra.mxu0 %v88
    %118 = vmatprep.subr.mxu0 %v87
    %119 = vmatpush1.msra.mxu0 %v86
    %120 = vmatprep.subr.mxu0 %v85
    %121 = vmatpush1.msra.mxu0 %v84
    %122 = vmatprep.subr.mxu0 %v83
    %123 = vmatpush1.msra.mxu0 %v82
    %124 = vmatprep.subr.mxu0 %v81
    %125 = vmatpush1.msra.mxu0 %v80
    %126 = vmatprep.subr.mxu0 %v79
    %127 = vmatpush1.msra.mxu0 %v78
    %128 = vmatprep.subr.mxu0 %v77
    %129 = vmatpush1.msra.mxu0 %v76
    %130 = vmatprep.subr.mxu0 %v75
    %131 = vmatpush1.msra.mxu0 %v74
    %132 = vmatprep.subr.mxu0 %v73
    %133 = vmatpush1.msra.mxu0 %v72
    %134 = vmatprep.subr.mxu0 %v71
    %135 = vmatpush1.msra.mxu0 %v70
    %136 = vmatprep.subr.mxu0 %v69
    %137 = vmatpush1.msra.mxu0 %v68
    %138 = vmatprep.subr.mxu0 %v67
    %139 = vmatpush1.msra.mxu0 %v66
    %140 = vmatprep.subr.mxu0 %v65
    %141 = vmatpush1.msra.mxu0 %v64
    %142 = vmatprep.subr.mxu0 0.0
    %143 = vmatpush2.msra.mxu0 0.0
    %144 = vmatprep.subr.mxu0 0.0
    %145 = vmatpush2.msra.mxu0 0.0
    %146 = vmatprep.subr.mxu0 0.0
    %147 = vmatpush2.msra.mxu0 0.0
    %148 = vmatprep.subr.mxu0 0.0
    %149 = vmatpush2.msra.mxu0 0.0
    %150 = vmatprep.subr.mxu0 0.0
    %151 = vmatpush2.msra.mxu0 0.0
    %152 = vmatprep.subr.mxu0 0.0
    %153 = vmatpush2.msra.mxu0 0.0
    %154 = vmatprep.subr.mxu0 0.0
    %155 = vmatpush2.msra.mxu0 0.0
    %156 = vmatprep.subr.mxu0 0.0
    %157 = vmatpush2.msra.mxu0 0.0
    %158 = vmatprep.subr.mxu0 0.0
    %159 = vmatpush2.msra.mxu0 0.0
    %160 = vmatprep.subr.mxu0 0.0
    %161 = vmatpush2.msra.mxu0 0.0
    %162 = vmatprep.subr.mxu0 0.0
    %163 = vmatpush2.msra.mxu0 0.0
    %164 = vmatprep.subr.mxu0 0.0
    %165 = vmatpush2.msra.mxu0 0.0
    %166 = vmatprep.subr.mxu0 0.0
    %167 = vmatpush2.msra.mxu0 0.0
    %168 = vmatprep.subr.mxu0 0.0
    %169 = vmatpush2.msra.mxu0 0.0
    %170 = vmatprep.subr.mxu0 0.0
    %171 = vmatpush2.msra.mxu0 0.0
    %172 = vmatprep.subr.mxu0 0.0
    %173 = vmatpush2.msra.mxu0 0.0
    %174 = vmatprep.mubr.f32.mxu0 0.0
    %175 = vmatmul.mubr.f32.gmra.mxu0 %v62
    %v176 = vpop.f32.mrf.mxu0
    %v177 = vadd.f32 %v103, %v176
    %v178 = vpop.f32.mrf.mxu0
    %v179 = vadd.f32 %v107, %v178
    %180 = vmatprep.mubr.f32.mxu0 0.0
    %181 = vmatmul.mubr.f32.gmra.mxu0 %v63
    %v182 = vpop.f32.mrf.mxu0
    %v183 = vadd.f32 %v103, %v182
    %v184 = vpop.f32.mrf.mxu0
    %v185 = vadd.f32 %v107, %v184
    %186 = vdwg.mxu0
    %v187 = vmul.f32 %v177, %v177
    %v188 = vmul.f32 %v179, %v179
    %v189 = vmul.f32 %v183, %v183
    %v190 = vmul.f32 %v185, %v185
    %v191 = vmul.f32 %v177, %v187
    %v192 = vmul.f32 %v179, %v188
    %v193 = vmul.f32 %v183, %v189
    %v194 = vmul.f32 %v185, %v190
    %v195 = vmul.f32 %v191, 0.044715
    %v196 = vmul.f32 %v192, 0.044715
    %v197 = vmul.f32 %v193, 0.044715
    %v198 = vmul.f32 %v194, 0.044715
    %v199 = vadd.f32 %v177, %v195
    %v200 = vadd.f32 %v179, %v196
    %v201 = vadd.f32 %v183, %v197
    %v202 = vadd.f32 %v185, %v198
    %v203 = vmul.f32 %v199, 0.7978846
    %v204 = vmul.f32 %v200, 0.7978846
    %v205 = vmul.f32 %v201, 0.7978846
    %v206 = vmul.f32 %v202, 0.7978846
    %v207 = vtanh.pop %v203
    %v208 = vtanh.pop %v204
    %v209 = vtanh.pop %v205
    %v210 = vtanh.pop %v206
    %v211 = vadd.f32 %v207, 1.0
    %v212 = vadd.f32 %v208, 1.0
    %v213 = vadd.f32 %v209, 1.0
    %v214 = vadd.f32 %v210, 1.0
    %v215 = vmul.f32 %v211, 0.5
    %v216 = vmul.f32 %v212, 0.5
    %v217 = vmul.f32 %v213, 0.5
    %v218 = vmul.f32 %v214, 0.5
    %v219 = vmul.f32 %v177, %v215
    %v220 = vmul.f32 %v179, %v216
    %v221 = vmul.f32 %v183, %v217
    %v222 = vmul.f32 %v185, %v218
    %v223 = vld [vmem:[#allocation7] sm:$0xff]
    %v224 = vld [vmem:[#allocation7 + $0x8] sm:$0xff]
    %v225 = vld [vmem:[#allocation7 + $0x10] sm:$0xff]
    %v226 = vld [vmem:[#allocation7 + $0x18] sm:$0xff]
    %v227 = vld [vmem:[#allocation7 + $0x20] sm:$0xff]
    %v228 = vld [vmem:[#allocation7 + $0x28] sm:$0xff]
    %v229 = vld [vmem:[#allocation7 + $0x30] sm:$0xff]
    %v230 = vld [vmem:[#allocation7 + $0x38] sm:$0xff]
    %v231 = vld [vmem:[#allocation7 + $0x40] sm:$0xff]
    %v232 = vld [vmem:[#allocation7 + $0x48] sm:$0xff]
    %v233 = vld [vmem:[#allocation7 + $0x50] sm:$0xff]
    %v234 = vld [vmem:[#allocation7 + $0x58] sm:$0xff]
    %v235 = vld [vmem:[#allocation7 + $0x60] sm:$0xff]
    %v236 = vld [vmem:[#allocation7 + $0x68] sm:$0xff]
    %v237 = vld [vmem:[#allocation7 + $0x70] sm:$0xff]
    %v238 = vld [vmem:[#allocation7 + $0x78] sm:$0xff]
    %v239 = vld [vmem:[#allocation7 + $0x80] sm:$0xff]
    %v240 = vld [vmem:[#allocation7 + $0x88] sm:$0xff]
    %v241 = vld [vmem:[#allocation7 + $0x90] sm:$0xff]
    %v242 = vld [vmem:[#allocation7 + $0x98] sm:$0xff]
    %v243 = vld [vmem:[#allocation7 + $0xa0] sm:$0xff]
    %v244 = vld [vmem:[#allocation7 + $0xa8] sm:$0xff]
    %v245 = vld [vmem:[#allocation7 + $0xb0] sm:$0xff]
    %v246 = vld [vmem:[#allocation7 + $0xb8] sm:$0xff]
    %v247 = vld [vmem:[#allocation7 + $0xc0] sm:$0xff]
    %v248 = vld [vmem:[#allocation7 + $0xc8] sm:$0xff]
    %v249 = vld [vmem:[#allocation7 + $0xd0] sm:$0xff]
    %v250 = vld [vmem:[#allocation7 + $0xd8] sm:$0xff]
    %v251 = vld [vmem:[#allocation7 + $0xe0] sm:$0xff]
    %v252 = vld [vmem:[#allocation7 + $0xe8] sm:$0xff]
    %v253 = vld [vmem:[#allocation7 + $0xf0] sm:$0xff]
    %v254 = vld [vmem:[#allocation7 + $0xf8] sm:$0xff]
    %255 = vmatprep.subr.mxu0 0.0
    %256 = vmatpush1.msra.mxu0 %v238
    %257 = vmatprep.subr.mxu0 0.0
    %258 = vmatpush1.msra.mxu0 %v237
    %259 = vmatprep.subr.mxu0 0.0
    %260 = vmatpush1.msra.mxu0 %v236
    %261 = vmatprep.subr.mxu0 0.0
    %262 = vmatpush1.msra.mxu0 %v235
    %263 = vmatprep.subr.mxu0 0.0
    %264 = vmatpush1.msra.mxu0 %v234
    %265 = vmatprep.subr.mxu0 0.0
    %266 = vmatpush1.msra.mxu0 %v233
    %267 = vmatprep.subr.mxu0 0.0
    %268 = vmatpush1.msra.mxu0 %v232
    %269 = vmatprep.subr.mxu0 0.0
    %270 = vmatpush1.msra.mxu0 %v231
    %271 = vmatprep.subr.mxu0 0.0
    %272 = vmatpush1.msra.mxu0 %v230
    %273 = vmatprep.subr.mxu0 0.0
    %274 = vmatpush1.msra.mxu0 %v229
    %275 = vmatprep.subr.mxu0 0.0
    %276 = vmatpush1.msra.mxu0 %v228
    %277 = vmatprep.subr.mxu0 0.0
    %278 = vmatpush1.msra.mxu0 %v227
    %279 = vmatprep.subr.mxu0 0.0
    %280 = vmatpush1.msra.mxu0 %v226
    %281 = vmatprep.subr.mxu0 0.0
    %282 = vmatpush1.msra.mxu0 %v225
    %283 = vmatprep.subr.mxu0 0.0
    %284 = vmatpush1.msra.mxu0 %v224
    %285 = vmatprep.subr.mxu0 0.0
    %286 = vmatpush1.msra.mxu0 %v223
    %287 = vmatprep.subr.mxu0 0.0
    %288 = vmatpush2.msra.mxu0 %v254
    %289 = vmatprep.subr.mxu0 0.0
    %290 = vmatpush2.msra.mxu0 %v253
    %291 = vmatprep.subr.mxu0 0.0
    %292 = vmatpush2.msra.mxu0 %v252
    %293 = vmatprep.subr.mxu0 0.0
    %294 = vmatpush2.msra.mxu0 %v251
    %295 = vmatprep.subr.mxu0 0.0
    %296 = vmatpush2.msra.mxu0 %v250
    %297 = vmatprep.subr.mxu0 0.0
    %298 = vmatpush2.msra.mxu0 %v249
    %299 = vmatprep.subr.mxu0 0.0
    %300 = vmatpush2.msra.mxu0 %v248
    %301 = vmatprep.subr.mxu0 0.0
    %302 = vmatpush2.msra.mxu0 %v247
    %303 = vmatprep.subr.mxu0 0.0
    %304 = vmatpush2.msra.mxu0 %v246
    %305 = vmatprep.subr.mxu0 0.0
    %306 = vmatpush2.msra.mxu0 %v245
    %307 = vmatprep.subr.mxu0 0.0
    %308 = vmatpush2.msra.mxu0 %v244
    %309 = vmatprep.subr.mxu0 0.0
    %310 = vmatpush2.msra.mxu0 %v243
    %311 = vmatprep.subr.mxu0 0.0
    %312 = vmatpush2.msra.mxu0 %v242
    %313 = vmatprep.subr.mxu0 0.0
    %314 = vmatpush2.msra.mxu0 %v241
    %315 = vmatprep.subr.mxu0 0.0
    %316 = vmatpush2.msra.mxu0 %v240
    %317 = vmatprep.subr.mxu0 0.0
    %318 = vmatpush2.msra.mxu0 %v239
    %319 = vmatprep.mubr.f32.mxu0 %v220
    %320 = vmatmul.mubr.f32.gmra.mxu0 %v219
    %v321 = vpop.f32.mrf.mxu0
    %v322 = vadd.f32 0.0, %v321
    %v323 = vpop.f32.mrf.mxu0
    %324 = vmatprep.mubr.f32.mxu0 %v222
    %325 = vmatmul.mubr.f32.gmra.mxu0 %v221
    %v326 = vpop.f32.mrf.mxu0
    %v327 = vadd.f32 0.0, %v326
    %v328 = vpop.f32.mrf.mxu0
    %329 = vdwg.mxu0
    %p330 = scmp.eq.s32.totalorder 0, 0
    // Predicated region
    $region34: #{tpu_custom_call.1} parent=1 // pred_check
      %p331 = pneg %p330
    $region35: #{tpu_custom_call.1} parent=1 // pred_check_branch
      %333 = sbr.rel (%p331) target = $region37
    $region36: #{tpu_custom_call.1} parent=1 // pred_region
      %v334 = vld [vmem:[%s4] sm:$0x1]
      %v336 = vlaneseq
      %v337 = vshrl.u32 %v336, 7
      %v338 = vsub.s32 0, %v337
      %v339 = vrot.slane %v334, %v338
      %v341 = vadd.f32 %v322, %v339
      %v342 = vadd.f32 %v327, %v339
      %343 = vst [vmem:[#allocation8] sm:$0xff] %v341
      %344 = vst [vmem:[#allocation8 + $0x8] sm:$0xff] %v342
    $region37: #{tpu_custom_call.1} parent=1 // pred_fallthru
      _
    %p345 = scmp.gt.s32.totalorder 0, 0
    // Predicated region
    $region38: #{tpu_custom_call.1} parent=1 // pred_check
      %p346 = pneg %p345
    $region39: #{tpu_custom_call.1} parent=1 // pred_check_branch
      %348 = sbr.rel (%p346) target = $region41
    $region40: #{tpu_custom_call.1} parent=1 // pred_region
      %v349 = vld [vmem:[#allocation8] sm:$0xff]
      %v350 = vld [vmem:[#allocation8 + $0x8] sm:$0xff]
      %v351 = vadd.f32 %v349, %v322
      %v352 = vadd.f32 %v350, %v327
      %353 = vst [vmem:[#allocation8] sm:$0xff] %v351
      %354 = vst [vmem:[#allocation8 + $0x8] sm:$0xff] %v352
    $region41: #{tpu_custom_call.1} parent=1 // pred_fallthru
      _
    // Predicated region
    $region42: #{tpu_custom_call.1} parent=1 // pred_check
      _
    $region43: #{tpu_custom_call.1} parent=1 // pred_check_branch
      %356 = sbr.rel (0) target = $region45
    $region44: #{tpu_custom_call.1} parent=1 // pred_region
      %s358 = ssub.s32 256, 256
      %359 = vsyncadd [#allocation4], %s358
      %s360 = sshll.u32 [#allocation8], 4
      %s361 = int_to_ptr.vmem [resolvable:$true] %s360
      %366 = dma.vmem_to_hbm [thread:$0]  %s361, 256, %s5, [#allocation4], 128, 128, 8
    $region45: #{tpu_custom_call.1} parent=1 // pred_fallthru
      _
    // Predicated region
    $region46: #{tpu_custom_call.1} parent=1 // pred_check
      _
    $region47: #{tpu_custom_call.1} parent=1 // pred_check_branch
      %368 = sbr.rel (0) target = $region49
    $region48: #{tpu_custom_call.1} parent=1 // pred_region
      %369 = dma.done [#allocation4], 256
    $region49: #{tpu_custom_call.1} parent=1 // pred_fallthru
      _
    %370 = vsyncpa [#allocation3], 1
    %371 = vsyncpa [#allocation6], 1
    %372 = vsyncpa [#allocation4], 1

</llo_original>
